<compile_context>
chip_gen: v7x
topology: tpu7x:2x2x1
jax: 0.10.0
libtpu: 0.0.40
codegen_flags: <defaults>
</compile_context>

<pallas_src>
import jax
import jax.numpy as jnp
from jax import lax
from jax.experimental import pallas as pl
from jax.experimental.pallas import tpu as pltpu


def _make_flip_kernel(nb, g):
    """Kernel reversing the last axis of a (rows, nb*g) block via mirrored g-chunks."""

    def kernel(perm_ref, x_ref, o_ref):
        perm = perm_ref[...]                      # resident g x g anti-identity
        if nb <= 8:
            # Static unroll for a handful of chunks.
            for k in range(nb):
                rev = jnp.dot(x_ref[:, k * g:(k + 1) * g], perm,
                              preferred_element_type=jnp.float32)
                o_ref[:, (nb - 1 - k) * g:(nb - k) * g] = rev.astype(o_ref.dtype)
        else:
            # Many chunks: keep live ranges tight with fori_loop + aligned pl.ds.
            def body(k, carry):
                s = pl.multiple_of(k * g, g)
                d = pl.multiple_of((nb - 1 - k) * g, g)
                rev = jnp.dot(x_ref[:, pl.ds(s, g)], perm,
                              preferred_element_type=jnp.float32)
                o_ref[:, pl.ds(d, g)] = rev.astype(o_ref.dtype)
                return carry
            lax.fori_loop(0, nb, body, 0, unroll=True)

    return kernel


def _vmem_budget():
    """(target tile bytes, vmem_limit_bytes) sized per TPU generation."""
    try:
        cap = pltpu.get_tpu_info().vmem_capacity_bytes
    except Exception:  # pragma: no cover - conservative default off-TPU/unknown
        cap = 0
    if cap >= 128 * 1024 * 1024:            # v5e / v6e: 128 MiB physical VMEM
        return 8 * 1024 * 1024, 64 * 1024 * 1024
    return 4 * 1024 * 1024, 32 * 1024 * 1024  # v7x (64 MiB) or unknown


def _pick_row_tile(rows, width, itemsize, target_bytes):
    """Row tile: multiple of 8, ~target_bytes, and >= 2 grid steps when rows > 8."""
    if rows <= 8:
        return rows                          # full-extent block (always legal)
    row_bytes = max(1, width * itemsize)
    cap = max(8, (target_bytes // row_bytes) // 8 * 8)
    rt = max(8, min(cap, (rows // 8) * 8))
    if pl.cdiv(rows, rt) < 2:
        # Force >= 2 steps so DMA double-buffering works and the "parallel"
        # row axis can shard across both v7x TensorCores.
        rt = max(8, pl.cdiv(pl.cdiv(rows, 2), 8) * 8)
    return rt


def _hflip_last_axis(x):
    """Reverse the last axis of `x` (rank >= 2) with a streaming Pallas kernel."""
    if not jnp.issubdtype(x.dtype, jnp.floating):
        # TODO(synk): integer dtypes use the XLA reverse path — the MXU
        # permutation matmul is float-only (lossy for |v| >= 2^24).
        return jnp.flip(x, axis=-1)

    orig_shape = x.shape
    w = orig_shape[-1]
    x2 = x.reshape(-1, w)

    # --- width handling -----------------------------------------------------
    if w % 128 != 0 and w > 512:
        # Large, awkward width: left-pad to a multiple of 128 so every store is
        # lane-dense; flip(pad ++ x)[:, :w] == flip(x).
        pad = (-w) % 128
        x2 = jnp.concatenate(
            [jnp.zeros((x2.shape[0], pad), x2.dtype), x2], axis=-1)
    else:
        pad = 0
    wp = w + pad
    if wp % 128 == 0:
        g = 256 if wp % 256 == 0 else 128    # chunked, lane-dense reversal
    else:
        g = wp                               # small width: one small perm
    nb = wp // g

    rows = x2.shape[0]
    target_bytes, vmem_limit = _vmem_budget()
    rt = _pick_row_tile(rows, wp, x2.dtype.itemsize, target_bytes)
    grid = (pl.cdiv(rows, rt),)

    # g x g anti-identity in the input's native dtype (0/1 entries -> exact).
    perm = jnp.flip(jnp.eye(g, dtype=x2.dtype), axis=0)

    out = pl.pallas_call(
        _make_flip_kernel(nb, g),
        out_shape=jax.ShapeDtypeStruct((rows, wp), x2.dtype),
        grid=grid,
        in_specs=[
            pl.BlockSpec((g, g), lambda i: (0, 0)),    # perm: DMA'd once, resident
            pl.BlockSpec((rt, wp), lambda i: (i, 0)),  # streamed row tiles
        ],
        out_specs=pl.BlockSpec((rt, wp), lambda i: (i, 0)),
        # In-place when the caller donates buffers inside a larger jit; XLA
        # inserts a copy otherwise, so the standalone demo stays correct.
        input_output_aliases={1: 0},
        compiler_params=pltpu.CompilerParams(
            dimension_semantics=("parallel",),
            vmem_limit_bytes=vmem_limit,
        ),
    )(perm, x2)

    if pad:
        out = out[:, :w]
    return out.reshape(orig_shape)


def sound_multi_random_hflip(data, label, flip_flag, mtype="single"):
    """Pallas implementation of SoundMultiRandomHorizontalFlip.forward.

    data:      (C, H, W)
    label:     (CL, HL, W)
    flip_flag: (1,) int32 — 1 iff torch.rand(1) < p (coin sampled outside).

    'multi' splits data into expansion / img channels, flips each and
    re-concatenates — numerically identical to flipping the whole tensor, so
    both modes share the whole-tensor kernel.  The flip decision is made at
    the JAX level with lax.cond so the no-flip path never touches HBM.
    """
    del mtype  # 'single' and 'multi' are numerically identical (see docstring)
    do_flip = flip_flag.reshape(-1)[0] != 0

    def _flip(args):
        d, l = args
        return _hflip_last_axis(d), _hflip_last_axis(l)

    def _identity(args):
        return args

    return lax.cond(do_flip, _flip, _identity, (data, label))


if __name__ == "__main__":
    key = jax.random.PRNGKey(0)
    k1, k2, k3, k4, k5 = jax.random.split(key, 5)

    flip_fn = jax.jit(sound_multi_random_hflip, static_argnames=("mtype",))

    # Shape set A: small W=16 -> single small-perm path.
    data_a = jax.random.normal(k1, (4, 16, 16), dtype=jnp.float32)
    label_a = jax.random.normal(k2, (1, 16, 16), dtype=jnp.float32)
    # Shape set B: W=512 -> 256-wide chunked, mirrored-store path.
    data_b = jax.random.normal(k3, (2, 8, 512), dtype=jnp.float32)
    label_b = jax.random.normal(k4, (1, 8, 512), dtype=jnp.float32)

    p = 0.5
    # torch.rand(1) < p coin, sampled in plain JAX and fed to the wrapper.
    rand_flag = (jax.random.uniform(k5, (1,)) < p).astype(jnp.int32)

    cases = [
        (data_a, label_a, jnp.array([1], jnp.int32)),
        (data_a, label_a, jnp.array([0], jnp.int32)),
        (data_a, label_a, rand_flag),
        (data_b, label_b, jnp.array([1], jnp.int32)),
    ]

    ok = True
    for data, label, flag in cases:
        for mtype in ("single", "multi"):
            out_data, out_label = flip_fn(data, label, flag, mtype=mtype)
            out_data = jax.block_until_ready(out_data)
            out_label = jax.block_until_ready(out_label)

            if bool(flag[0]):
                ref_data = jnp.flip(data, axis=-1)
                ref_label = jnp.flip(label, axis=-1)
            else:
                ref_data, ref_label = data, label

            ok &= bool(jnp.allclose(out_data, ref_data, atol=1e-6))
            ok &= bool(jnp.allclose(out_label, ref_label, atol=1e-6))

    print("KERNEL_OK" if ok else "KERNEL_MISMATCH")
</pallas_src>

<mosaic_0001>
module attributes {stable_mosaic.version = 11 : i64} {
  func.func @kernel(%arg0: i32, %arg1: memref<16x16xf32, #tpu.memory_space<vmem>>, %arg2: memref<8x16xf32, #tpu.memory_space<vmem>>, %arg3: memref<8x16xf32, #tpu.memory_space<vmem>>) attributes {dimension_semantics = [#tpu.dimension_semantics<parallel>], iteration_bounds = array<i64: 2>, scalar_prefetch = 0 : i64, scratch_operands = 0 : i64, tpu.core_type = #tpu.core_type<tc>, window_params = [{pipeline_mode = #tpu.pipeline_mode<synchronous>, transform_indices = @transform_0, window_bounds = array<i64: 16, 16>}, {transform_indices = @transform_1, window_bounds = array<i64: 8, 16>}, {transform_indices = @transform_2, window_bounds = array<i64: 8, 16>}]} {
    %c0 = arith.constant 0 : index
    %c0_0 = arith.constant 0 : index
    %0 = vector.load %arg1[%c0, %c0_0] : memref<16x16xf32, #tpu.memory_space<vmem>>, vector<16x16xf32>
    %c0_1 = arith.constant 0 : index
    %c0_2 = arith.constant 0 : index
    %1 = vector.load %arg2[%c0_1, %c0_2] : memref<8x16xf32, #tpu.memory_space<vmem>>, vector<8x16xf32>
    %cst = arith.constant dense<0.000000e+00> : vector<8x16xf32>
    %2 = tpu.matmul %1, %0, %cst {dimension_numbers = #tpu.dot_dimension_numbers<[1], [0], [0], [1], [0, 0, 1, 1], [], []>} : vector<8x16xf32>, vector<16x16xf32>, vector<8x16xf32> -> vector<8x16xf32>
    %c0_3 = arith.constant 0 : index
    %c0_4 = arith.constant 0 : index
    %3 = vector.load %arg3[%c0_3, %c0_4] : memref<8x16xf32, #tpu.memory_space<vmem>>, vector<8x16xf32>
    tpu.vector_store %arg3[%c0_3, %c0_4], %2 {strides = array<i32>} : memref<8x16xf32, #tpu.memory_space<vmem>>, vector<8x16xf32>,
    return
  }
  func.func @transform_0(%arg0: i32) -> (i32, i32) {
    %c0_i32 = arith.constant 0 : i32
    %c0_i32_0 = arith.constant 0 : i32
    %c0_i32_1 = arith.constant 0 : i32
    return %c0_i32, %c0_i32_0 : i32, i32
  }
  func.func @transform_1(%arg0: i32) -> (i32, i32) {
    %c0_i32 = arith.constant 0 : i32
    %c0_i32_0 = arith.constant 0 : i32
    return %arg0, %c0_i32 : i32, i32
  }
  func.func @transform_2(%arg0: i32) -> (i32, i32) {
    %c0_i32 = arith.constant 0 : i32
    %c0_i32_0 = arith.constant 0 : i32
    return %arg0, %c0_i32 : i32, i32
  }
}

module attributes {stable_mosaic.version = 11 : i64} {
  func.func @kernel(%arg0: i32, %arg1: memref<16x16xf32, #tpu.memory_space<vmem>>, %arg2: memref<32x16xf32, #tpu.memory_space<vmem>>, %arg3: memref<32x16xf32, #tpu.memory_space<vmem>>) attributes {dimension_semantics = [#tpu.dimension_semantics<parallel>], iteration_bounds = array<i64: 2>, scalar_prefetch = 0 : i64, scratch_operands = 0 : i64, tpu.core_type = #tpu.core_type<tc>, window_params = [{pipeline_mode = #tpu.pipeline_mode<synchronous>, transform_indices = @transform_0, window_bounds = array<i64: 16, 16>}, {transform_indices = @transform_1, window_bounds = array<i64: 32, 16>}, {transform_indices = @transform_2, window_bounds = array<i64: 32, 16>}]} {
    %c0 = arith.constant 0 : index
    %c0_0 = arith.constant 0 : index
    %0 = vector.load %arg1[%c0, %c0_0] : memref<16x16xf32, #tpu.memory_space<vmem>>, vector<16x16xf32>
    %c0_1 = arith.constant 0 : index
    %c0_2 = arith.constant 0 : index
    %1 = vector.load %arg2[%c0_1, %c0_2] : memref<32x16xf32, #tpu.memory_space<vmem>>, vector<32x16xf32>
    %cst = arith.constant dense<0.000000e+00> : vector<32x16xf32>
    %2 = tpu.matmul %1, %0, %cst {dimension_numbers = #tpu.dot_dimension_numbers<[1], [0], [0], [1], [0, 0, 1, 1], [], []>} : vector<32x16xf32>, vector<16x16xf32>, vector<32x16xf32> -> vector<32x16xf32>
    %c0_3 = arith.constant 0 : index
    %c0_4 = arith.constant 0 : index
    %3 = vector.load %arg3[%c0_3, %c0_4] : memref<32x16xf32, #tpu.memory_space<vmem>>, vector<32x16xf32>
    tpu.vector_store %arg3[%c0_3, %c0_4], %2 {strides = array<i32>} : memref<32x16xf32, #tpu.memory_space<vmem>>, vector<32x16xf32>,
    return
  }
  func.func @transform_0(%arg0: i32) -> (i32, i32) {
    %c0_i32 = arith.constant 0 : i32
    %c0_i32_0 = arith.constant 0 : i32
    %c0_i32_1 = arith.constant 0 : i32
    return %c0_i32, %c0_i32_0 : i32, i32
  }
  func.func @transform_1(%arg0: i32) -> (i32, i32) {
    %c0_i32 = arith.constant 0 : i32
    %c0_i32_0 = arith.constant 0 : i32
    return %arg0, %c0_i32 : i32, i32
  }
  func.func @transform_2(%arg0: i32) -> (i32, i32) {
    %c0_i32 = arith.constant 0 : i32
    %c0_i32_0 = arith.constant 0 : i32
    return %arg0, %c0_i32 : i32, i32
  }
}

</mosaic_0001>

<llo_original>
// kernel: branch_1_fun.3
$region0: #{branch_1_fun.3}
  #allocation0 [shape = 'u32[]', space=smem, size = 0x4, offset = 0x4, fixed_abs, tag = 'smem constant byte address 0x4 - core index']
  #allocation1 [shape = 'u32[144,128]{1,0:T(1,128)}', space=vmem, size = 0x12000, scoped, tag = 'internal scratch']
  %s0 = inlined_call_operand.vmem [shape: f32[16,16], index: 0, kind: input, shape index: {}]
  %s1 = inlined_call_operand.hbm [shape: f32[16,16], index: 1, kind: input, shape index: {}, may-alias: {1,2}]
  %s2 = inlined_call_operand.hbm [shape: f32[16,16], index: 2, kind: output, shape index: {}, may-alias: {1,2}]
  %s3 = sld [smem:[#allocation0]]
  $region45: #{branch_1_fun.3} parent=0
    _
  %s5 = ssub.s32 1, %s3
  %s6 = scalar_select 0, %s5, %s3
  $region1: #{branch_1_fun.3} parent=0
    #allocation2 [shape = 'u8[8192]{0}', space=vmem, size = 0x2000, scoped, tag = 'input window, operand 1']
    #allocation3 [shape = 's32[2]{0}', space=sflag, size = 0x8, scoped, tag = 'scoped memory for branch_1_fun.3']
    #allocation4 [shape = 's32[2]{0}', space=sflag, size = 0x8, scoped, tag = 'scoped memory for branch_1_fun.3']
    #allocation5 [shape = 'u8[8192]{0}', space=vmem, size = 0x2000, scoped, tag = 'output window, operand 0']
    %7 = vsyncpa [#allocation3], 0
    %s8 = scalar_lea.sflag [#allocation3], 1
    %9 = vsyncpa %s8, 0
    %10 = vsyncpa [#allocation4], 0
    %s11 = scalar_lea.sflag [#allocation4], 1
    %12 = vsyncpa %s11, 0
    loop: start=0, step=1, limit=4
    $region2: #{branch_1_fun.3} parent=1 // loop_pre_header
      _
    $region3: #{branch_1_fun.3} parent=1 // loop_header
      %s14 = sphi 0, %s18
      %p15 = scmp.ge.s32.totalorder %s14, 4
      %s22 = sphi 0, %s22
      %s24 = sphi 0, %s22
      %s25 = sphi 0, %s24
      %s39 = sphi 0, %s25
      %s45 = sphi 0, %s47
      %s48 = sphi 0, %s45
      %s49 = sphi 0, %s48
      %s65 = sphi 0, %s49
      %s71 = sphi 0, %s73
      %s74 = sphi 0, %s71
      %s75 = sphi 0, %s74
      %s91 = sphi 0, %s75
    $region4: #{branch_1_fun.3} parent=1 // loop_header_branch
      %17 = sbr.rel (%p15) target = $region8
    $region5: #{branch_1_fun.3} parent=1 // loop_body
      %s19 = ssub.s32 %s14, 1
      %s20 = ssub.s32 %s14, 2
      %s21 = sadd.s32 %s14, 1
      %s23 = sadd.s32 %s22, 1
      %p26 = scmp.eq.s32.totalorder %s14, 1
      %p27 = scmp.ne.s32.totalorder %s22, %s24
      %p28 = scmp.eq.s32.totalorder %s14, 0
      %p29 = por %p27, %p28
      %p30 = scmp.ne.s32.totalorder %s22, %s24
      %p31 = scmp.eq.s32.totalorder %s19, 1
      %p32 = por %p30, %p31
      %p33 = scmp.ne.s32.totalorder %s24, %s25
      %p34 = scmp.eq.s32.totalorder %s19, 0
      %p35 = por %p33, %p34
      %p36 = scmp.ne.s32.totalorder %s24, %s25
      %p37 = scmp.eq.s32.totalorder %s20, 1
      %p38 = por %p36, %p37
      %p40 = scmp.ne.s32.totalorder %s25, %s39
      %p41 = scmp.eq.s32.totalorder %s20, 0
      %p42 = por %p40, %p41
      %s43 = ssub.s32 %s14, %s21
      %p44 = scmp.eq.s32.totalorder %s43, 0
      %s46 = sadd.s32 %s45, 1
      %s47 = scalar_select %p44, %s45, %s46
      %p50 = pneg %p44
      %p51 = scmp.eq.s32.totalorder %s14, 1
      %p52 = por %p50, %p51
      %p53 = scmp.ne.s32.totalorder %s45, %s48
      %p54 = scmp.eq.s32.totalorder %s14, 0
      %p55 = por %p53, %p54
      %p56 = scmp.ne.s32.totalorder %s45, %s48
      %p57 = scmp.eq.s32.totalorder %s19, 1
      %p58 = por %p56, %p57
      %p59 = scmp.ne.s32.totalorder %s48, %s49
      %p60 = scmp.eq.s32.totalorder %s19, 0
      %p61 = por %p59, %p60
      %p62 = scmp.ne.s32.totalorder %s48, %s49
      %p63 = scmp.eq.s32.totalorder %s20, 1
      %p64 = por %p62, %p63
      %p66 = scmp.ne.s32.totalorder %s49, %s65
      %p67 = scmp.eq.s32.totalorder %s20, 0
      %p68 = por %p66, %p67
      %s69 = ssub.s32 %s14, %s21
      %p70 = scmp.eq.s32.totalorder %s69, 0
      %s72 = sadd.s32 %s71, 1
      %s73 = scalar_select %p70, %s71, %s72
      %p76 = pneg %p70
      %p77 = scmp.eq.s32.totalorder %s14, 1
      %p78 = por %p76, %p77
      %p79 = scmp.ne.s32.totalorder %s71, %s74
      %p80 = scmp.eq.s32.totalorder %s14, 0
      %p81 = por %p79, %p80
      %p82 = scmp.ne.s32.totalorder %s71, %s74
      %p83 = scmp.eq.s32.totalorder %s19, 1
      %p84 = por %p82, %p83
      %p85 = scmp.ne.s32.totalorder %s74, %s75
      %p86 = scmp.eq.s32.totalorder %s19, 0
      %p87 = por %p85, %p86
      %p88 = scmp.ne.s32.totalorder %s74, %s75
      %p89 = scmp.eq.s32.totalorder %s20, 1
      %p90 = por %p88, %p89
      %p92 = scmp.ne.s32.totalorder %s75, %s91
      %p93 = scmp.eq.s32.totalorder %s20, 0
      %p94 = por %p92, %p93
      %p95 = scmp.le.s32.totalorder 1, %s14
      %p96 = scmp.lt.s32.totalorder %s14, 3
      %p97 = pnand %p95, %p96
      %p98 = pneg %p97
      // Predicated region
      $region9: #{branch_1_fun.3} parent=5 // pred_check
        _
      $region10: #{branch_1_fun.3} parent=5 // pred_check_branch
        %100 = sbr.rel (%p97) target = $region12
      $region11: #{branch_1_fun.3} parent=5 // pred_region
        %s101 = ssub.s32 %s14, 1
        // Predicated region
        $region13: #{branch_1_fun.3} parent=11 // pred_check
          %p102 = pneg %p35
        $region14: #{branch_1_fun.3} parent=11 // pred_check_branch
          %104 = sbr.rel (%p102) target = $region16
        $region15: #{branch_1_fun.3} parent=11 // pred_region
          _
        $region16: #{branch_1_fun.3} parent=11 // pred_fallthru
          _
      $region12: #{branch_1_fun.3} parent=5 // pred_fallthru
        _
      %p105 = scmp.lt.s32.totalorder %s14, 2
      // Predicated region
      $region17: #{branch_1_fun.3} parent=5 // pred_check
        %p106 = pneg %p105
      $region18: #{branch_1_fun.3} parent=5 // pred_check_branch
        %108 = sbr.rel (%p106) target = $region20
      $region19: #{branch_1_fun.3} parent=5 // pred_region
        // Predicated region
        $region21: #{branch_1_fun.3} parent=19 // pred_check
          %p109 = pneg %p55
        $region22: #{branch_1_fun.3} parent=19 // pred_check_branch
          %111 = sbr.rel (%p109) target = $region24
        $region23: #{branch_1_fun.3} parent=19 // pred_region
          %s112 = sand.u32 %s45, 1
          %s113 = scalar_lea.sflag [#allocation3], %s112
          %s114 = sand.u32 %s45, 1
          %s115 = smul.addr %s114, 8
          %s116 = scalar_lea.vmem [#allocation2], %s115
          %s118 = ssub.s32 128, 128
          %119 = vsyncadd %s113, %s118
          %s120 = smul.addr %s14, 128
          %s121 = scalar_lea.hbm %s1, %s120
          %s123 = sshll.u32 %s116, 4
          %s124 = int_to_ptr.vmem [resolvable:$true] %s123
          %126 = dma.hbm_to_vmem [thread:$0]  %s121, 128, %s124, %s113
        $region24: #{branch_1_fun.3} parent=19 // pred_fallthru
          _
      $region20: #{branch_1_fun.3} parent=5 // pred_fallthru
        _
      %p127 = scmp.le.s32.totalorder 1, %s14
      %p128 = scmp.lt.s32.totalorder %s14, 3
      %p129 = pnand %p127, %p128
      %p130 = pneg %p129
      // Predicated region
      $region25: #{branch_1_fun.3} parent=5 // pred_check
        _
      $region26: #{branch_1_fun.3} parent=5 // pred_check_branch
        %132 = sbr.rel (%p129) target = $region28
      $region27: #{branch_1_fun.3} parent=5 // pred_region
        %s133 = ssub.s32 %s14, 1
        %s134 = sand.u32 %s48, 1
        %s135 = scalar_lea.sflag [#allocation3], %s134
        %s136 = sand.u32 %s48, 1
        %s137 = smul.addr %s136, 8
        %s138 = scalar_lea.vmem [#allocation2], %s137
        // Predicated region
        $region29: #{branch_1_fun.3} parent=27 // pred_check
          %p139 = pneg %p61
        $region30: #{branch_1_fun.3} parent=27 // pred_check_branch
          %141 = sbr.rel (%p139) target = $region32
        $region31: #{branch_1_fun.3} parent=27 // pred_region
          %142 = dma.done %s135, 128
        $region32: #{branch_1_fun.3} parent=27 // pred_fallthru
          _
        %p143 = pneg %p35
        %p144 = pneg %p32
        %s145 = sand.u32 %s48, 1
        %s146 = scalar_lea.sflag [#allocation3], %s145
        %s147 = sand.u32 %s48, 1
        %s148 = smul.addr %s147, 8
        %s149 = scalar_lea.vmem [#allocation2], %s148
        %p150 = pneg %p61
        %p151 = pneg %p58
        %p152 = pneg %p87
        %p153 = pneg %p84
        %s154 = sand.u32 %s74, 1
        %s155 = scalar_lea.sflag [#allocation4], %s154
        %s156 = sand.u32 %s74, 1
        %s157 = smul.addr %s156, 8
        %s158 = scalar_lea.vmem [#allocation5], %s157
        %v159 = vld [vmem:[%s0] sm:$0xff]
        %v160 = vld [vmem:[%s0 + $0x8] sm:$0xff]
        %v161 = vld [vmem:[%s138] sm:$0xff]
        %vm162 = vcmask 130048
        %v164 = vsel %vm162, %v161, 0
        %166 = vmatprep.subr.mxu0 0.0
        %167 = vmatpush1.msra.mxu0 %v159
        %168 = vmatprep.subr.mxu0 0.0
        %169 = vmatpush1.msra.mxu0 %v160
        %170 = vmatprep.subr.mxu0 0.0
        %171 = vmatpush1.msra.mxu0 0.0
        %172 = vmatprep.subr.mxu0 0.0
        %173 = vmatpush1.msra.mxu0 0.0
        %174 = vmatprep.subr.mxu0 0.0
        %175 = vmatpush1.msra.mxu0 0.0
        %176 = vmatprep.subr.mxu0 0.0
        %177 = vmatpush1.msra.mxu0 0.0
        %178 = vmatprep.subr.mxu0 0.0
        %179 = vmatpush1.msra.mxu0 0.0
        %180 = vmatprep.subr.mxu0 0.0
        %181 = vmatpush1.msra.mxu0 0.0
        %182 = vmatprep.subr.mxu0 0.0
        %183 = vmatpush1.msra.mxu0 0.0
        %184 = vmatprep.subr.mxu0 0.0
        %185 = vmatpush1.msra.mxu0 0.0
        %186 = vmatprep.subr.mxu0 0.0
        %187 = vmatpush1.msra.mxu0 0.0
        %188 = vmatprep.subr.mxu0 0.0
        %189 = vmatpush1.msra.mxu0 0.0
        %190 = vmatprep.subr.mxu0 0.0
        %191 = vmatpush1.msra.mxu0 0.0
        %192 = vmatprep.subr.mxu0 0.0
        %193 = vmatpush1.msra.mxu0 0.0
        %194 = vmatprep.subr.mxu0 0.0
        %195 = vmatpush1.msra.mxu0 0.0
        %196 = vmatprep.subr.mxu0 0.0
        %197 = vmatpush1.msra.mxu0 0.0
        %198 = vmatprep.subr.mxu0 0.0
        %199 = vmatpush1.msra.mxu0 0.0
        %200 = vmatprep.subr.mxu0 0.0
        %201 = vmatpush1.msra.mxu0 0.0
        %202 = vmatprep.subr.mxu0 0.0
        %203 = vmatpush1.msra.mxu0 0.0
        %204 = vmatprep.subr.mxu0 0.0
        %205 = vmatpush1.msra.mxu0 0.0
        %206 = vmatprep.subr.mxu0 0.0
        %207 = vmatpush1.msra.mxu0 0.0
        %208 = vmatprep.subr.mxu0 0.0
        %209 = vmatpush1.msra.mxu0 0.0
        %210 = vmatprep.subr.mxu0 0.0
        %211 = vmatpush1.msra.mxu0 0.0
        %212 = vmatprep.subr.mxu0 0.0
        %213 = vmatpush1.msra.mxu0 0.0
        %214 = vmatprep.subr.mxu0 0.0
        %215 = vmatpush1.msra.mxu0 0.0
        %216 = vmatprep.subr.mxu0 0.0
        %217 = vmatpush1.msra.mxu0 0.0
        %218 = vmatprep.subr.mxu0 0.0
        %219 = vmatpush1.msra.mxu0 0.0
        %220 = vmatprep.subr.mxu0 0.0
        %221 = vmatpush1.msra.mxu0 0.0
        %222 = vmatprep.subr.mxu0 0.0
        %223 = vmatpush1.msra.mxu0 0.0
        %224 = vmatprep.subr.mxu0 0.0
        %225 = vmatpush1.msra.mxu0 0.0
        %226 = vmatprep.subr.mxu0 0.0
        %227 = vmatpush1.msra.mxu0 0.0
        %228 = vmatprep.subr.mxu0 0.0
        %229 = vmatpush1.msra.mxu0 0.0
        %230 = vmatprep.mubr.f32.mxu0 0.0
        %231 = vmatmul.mubr.f32.gmra.mrb[0].mxu0 %v164
        %v232 = vpop.f32.mrb[0].mxu0
        %v233 = vadd.f32 0.0, %v232
        %v234 = vpop.f32.mrb[0].mxu0
        %235 = vdwg.mxu0
        %236 = vst.msk [vmem:[%s158] sm:$0xff] %vm162, %v233
        %s237 = sand.u32 %s74, 1
        %s238 = scalar_lea.sflag [#allocation4], %s237
        %s239 = sand.u32 %s74, 1
        %s240 = smul.addr %s239, 8
        %s241 = scalar_lea.vmem [#allocation5], %s240
        // Predicated region
        $region33: #{branch_1_fun.3} parent=27 // pred_check
          %p242 = pneg %p84
        $region34: #{branch_1_fun.3} parent=27 // pred_check_branch
          %244 = sbr.rel (%p242) target = $region36
        $region35: #{branch_1_fun.3} parent=27 // pred_region
          %s246 = ssub.s32 128, 128
          %247 = vsyncadd %s238, %s246
          %s248 = smul.addr %s19, 128
          %s249 = scalar_lea.hbm %s2, %s248
          %s251 = sshll.u32 %s241, 4
          %s252 = int_to_ptr.vmem [resolvable:$true] %s251
          %254 = dma.vmem_to_hbm [thread:$0]  %s252, 128, %s249, %s238
        $region36: #{branch_1_fun.3} parent=27 // pred_fallthru
          _
      $region28: #{branch_1_fun.3} parent=5 // pred_fallthru
        _
      %p255 = scmp.le.s32.totalorder 2, %s14
      // Predicated region
      $region37: #{branch_1_fun.3} parent=5 // pred_check
        %p256 = pneg %p255
      $region38: #{branch_1_fun.3} parent=5 // pred_check_branch
        %258 = sbr.rel (%p256) target = $region40
      $region39: #{branch_1_fun.3} parent=5 // pred_region
        %s259 = ssub.s32 %s14, 2
        // Predicated region
        $region41: #{branch_1_fun.3} parent=39 // pred_check
          %p260 = pneg %p90
        $region42: #{branch_1_fun.3} parent=39 // pred_check_branch
          %262 = sbr.rel (%p260) target = $region44
        $region43: #{branch_1_fun.3} parent=39 // pred_region
          %s263 = sand.u32 %s75, 1
          %s264 = scalar_lea.sflag [#allocation4], %s263
          %s265 = sand.u32 %s75, 1
          %s266 = smul.addr %s265, 8
          %s267 = scalar_lea.vmem [#allocation5], %s266
          %268 = dma.done %s264, 128
        $region44: #{branch_1_fun.3} parent=39 // pred_fallthru
          _
      $region40: #{branch_1_fun.3} parent=5 // pred_fallthru
        _
    $region6: #{branch_1_fun.3} parent=1 // loop_footer
      %s18 = sadd.s32 1, %s14
    $region7: #{branch_1_fun.3} parent=1 // loop_footer_branch
      %13 = sbr.rel target = $region3
    $region8: #{branch_1_fun.3} parent=1 // loop_exit
      _
    %269 = vsyncpa [#allocation3], 1
    %s270 = scalar_lea.sflag [#allocation3], 1
    %271 = vsyncpa %s270, 1
    %272 = vsyncpa [#allocation4], 1
    %s273 = scalar_lea.sflag [#allocation4], 1
    %274 = vsyncpa %s273, 1

// kernel: branch_1_fun.2
$region0: #{branch_1_fun.2}
  #allocation0 [shape = 'u32[]', space=smem, size = 0x4, offset = 0x4, fixed_abs, tag = 'smem constant byte address 0x4 - core index']
  #allocation1 [shape = 'u32[144,128]{1,0:T(1,128)}', space=vmem, size = 0x12000, scoped, tag = 'internal scratch']
  %s0 = inlined_call_operand.vmem [shape: f32[16,16], index: 0, kind: input, shape index: {}]
  %s1 = inlined_call_operand.vmem [shape: f32[64,16], index: 1, kind: input, shape index: {}, may-alias: {1,2}]
  %s2 = inlined_call_operand.vmem [shape: f32[64,16], index: 2, kind: output, shape index: {}, may-alias: {1,2}]
  %s3 = sld [smem:[#allocation0]]
  $region41: #{branch_1_fun.2} parent=0
    _
  %s5 = ssub.s32 1, %s3
  %s6 = scalar_select 0, %s5, %s3
  loop: start=0, step=1, limit=4
  $region2: #{branch_1_fun.2} parent=0 // loop_pre_header
    _
  $region3: #{branch_1_fun.2} parent=0 // loop_header
    %s8 = sphi 0, %s12
    %p9 = scmp.ge.s32.totalorder %s8, 4
    %s16 = sphi 0, %s16
    %s18 = sphi 0, %s16
    %s19 = sphi 0, %s18
    %s33 = sphi 0, %s19
    %s39 = sphi 0, %s41
    %s42 = sphi 0, %s39
    %s43 = sphi 0, %s42
    %s59 = sphi 0, %s43
    %s65 = sphi 0, %s67
    %s68 = sphi 0, %s65
    %s69 = sphi 0, %s68
    %s85 = sphi 0, %s69
  $region4: #{branch_1_fun.2} parent=0 // loop_header_branch
    %11 = sbr.rel (%p9) target = $region8
  $region5: #{branch_1_fun.2} parent=0 // loop_body
    %s13 = ssub.s32 %s8, 1
    %s14 = ssub.s32 %s8, 2
    %s15 = sadd.s32 %s8, 1
    %s17 = sadd.s32 %s16, 1
    %p20 = scmp.eq.s32.totalorder %s8, 1
    %p21 = scmp.ne.s32.totalorder %s16, %s18
    %p22 = scmp.eq.s32.totalorder %s8, 0
    %p23 = por %p21, %p22
    %p24 = scmp.ne.s32.totalorder %s16, %s18
    %p25 = scmp.eq.s32.totalorder %s13, 1
    %p26 = por %p24, %p25
    %p27 = scmp.ne.s32.totalorder %s18, %s19
    %p28 = scmp.eq.s32.totalorder %s13, 0
    %p29 = por %p27, %p28
    %p30 = scmp.ne.s32.totalorder %s18, %s19
    %p31 = scmp.eq.s32.totalorder %s14, 1
    %p32 = por %p30, %p31
    %p34 = scmp.ne.s32.totalorder %s19, %s33
    %p35 = scmp.eq.s32.totalorder %s14, 0
    %p36 = por %p34, %p35
    %s37 = ssub.s32 %s8, %s15
    %p38 = scmp.eq.s32.totalorder %s37, 0
    %s40 = sadd.s32 %s39, 1
    %s41 = scalar_select %p38, %s39, %s40
    %p44 = pneg %p38
    %p45 = scmp.eq.s32.totalorder %s8, 1
    %p46 = por %p44, %p45
    %p47 = scmp.ne.s32.totalorder %s39, %s42
    %p48 = scmp.eq.s32.totalorder %s8, 0
    %p49 = por %p47, %p48
    %p50 = scmp.ne.s32.totalorder %s39, %s42
    %p51 = scmp.eq.s32.totalorder %s13, 1
    %p52 = por %p50, %p51
    %p53 = scmp.ne.s32.totalorder %s42, %s43
    %p54 = scmp.eq.s32.totalorder %s13, 0
    %p55 = por %p53, %p54
    %p56 = scmp.ne.s32.totalorder %s42, %s43
    %p57 = scmp.eq.s32.totalorder %s14, 1
    %p58 = por %p56, %p57
    %p60 = scmp.ne.s32.totalorder %s43, %s59
    %p61 = scmp.eq.s32.totalorder %s14, 0
    %p62 = por %p60, %p61
    %s63 = ssub.s32 %s8, %s15
    %p64 = scmp.eq.s32.totalorder %s63, 0
    %s66 = sadd.s32 %s65, 1
    %s67 = scalar_select %p64, %s65, %s66
    %p70 = pneg %p64
    %p71 = scmp.eq.s32.totalorder %s8, 1
    %p72 = por %p70, %p71
    %p73 = scmp.ne.s32.totalorder %s65, %s68
    %p74 = scmp.eq.s32.totalorder %s8, 0
    %p75 = por %p73, %p74
    %p76 = scmp.ne.s32.totalorder %s65, %s68
    %p77 = scmp.eq.s32.totalorder %s13, 1
    %p78 = por %p76, %p77
    %p79 = scmp.ne.s32.totalorder %s68, %s69
    %p80 = scmp.eq.s32.totalorder %s13, 0
    %p81 = por %p79, %p80
    %p82 = scmp.ne.s32.totalorder %s68, %s69
    %p83 = scmp.eq.s32.totalorder %s14, 1
    %p84 = por %p82, %p83
    %p86 = scmp.ne.s32.totalorder %s69, %s85
    %p87 = scmp.eq.s32.totalorder %s14, 0
    %p88 = por %p86, %p87
    %p89 = scmp.le.s32.totalorder 1, %s8
    %p90 = scmp.lt.s32.totalorder %s8, 3
    %p91 = pnand %p89, %p90
    %p92 = pneg %p91
    // Predicated region
    $region9: #{branch_1_fun.2} parent=5 // pred_check
      _
    $region10: #{branch_1_fun.2} parent=5 // pred_check_branch
      %94 = sbr.rel (%p91) target = $region12
    $region11: #{branch_1_fun.2} parent=5 // pred_region
      %s95 = ssub.s32 %s8, 1
      // Predicated region
      $region13: #{branch_1_fun.2} parent=11 // pred_check
        %p96 = pneg %p29
      $region14: #{branch_1_fun.2} parent=11 // pred_check_branch
        %98 = sbr.rel (%p96) target = $region16
      $region15: #{branch_1_fun.2} parent=11 // pred_region
        _
      $region16: #{branch_1_fun.2} parent=11 // pred_fallthru
        _
    $region12: #{branch_1_fun.2} parent=5 // pred_fallthru
      _
    %p99 = scmp.lt.s32.totalorder %s8, 2
    // Predicated region
    $region17: #{branch_1_fun.2} parent=5 // pred_check
      %p100 = pneg %p99
    $region18: #{branch_1_fun.2} parent=5 // pred_check_branch
      %102 = sbr.rel (%p100) target = $region20
    $region19: #{branch_1_fun.2} parent=5 // pred_region
      // Predicated region
      $region21: #{branch_1_fun.2} parent=19 // pred_check
        %p103 = pneg %p49
      $region22: #{branch_1_fun.2} parent=19 // pred_check_branch
        %105 = sbr.rel (%p103) target = $region24
      $region23: #{branch_1_fun.2} parent=19 // pred_region
        %s106 = smul.u32 4, %s8
        %p107 = scmp.lt.s32.totalorder %s106, 7
        %s108 = scalar_select %p107, %s106, 7
        %s109 = smul.addr %s108, 8
        %s110 = scalar_lea.vmem %s1, %s109
        %s111 = smul.u32 4, %s8
      $region24: #{branch_1_fun.2} parent=19 // pred_fallthru
        _
    $region20: #{branch_1_fun.2} parent=5 // pred_fallthru
      _
    %p112 = scmp.le.s32.totalorder 1, %s8
    %p113 = scmp.lt.s32.totalorder %s8, 3
    %p114 = pnand %p112, %p113
    %p115 = pneg %p114
    // Predicated region
    $region25: #{branch_1_fun.2} parent=5 // pred_check
      _
    $region26: #{branch_1_fun.2} parent=5 // pred_check_branch
      %117 = sbr.rel (%p114) target = $region28
    $region27: #{branch_1_fun.2} parent=5 // pred_region
      %s118 = ssub.s32 %s8, 1
      %p119 = pneg %p29
      %p120 = pneg %p26
      %s121 = smul.u32 4, %s13
      %p122 = scmp.lt.s32.totalorder %s121, 7
      %s123 = scalar_select %p122, %s121, 7
      %s124 = smul.addr %s123, 8
      %s125 = scalar_lea.vmem %s1, %s124
      %p126 = pneg %p55
      %p127 = pneg %p52
      %p128 = pneg %p81
      %p129 = pneg %p78
      %s130 = smul.u32 4, %s13
      %p131 = scmp.lt.s32.totalorder %s130, 7
      %s132 = scalar_select %p131, %s130, 7
      %s133 = smul.addr %s132, 8
      %s134 = scalar_lea.vmem %s2, %s133
      %s135 = smul.u32 4, %s13
      %p136 = scmp.lt.s32.totalorder %s135, 7
      %s137 = scalar_select %p136, %s135, 7
      %s138 = smul.addr %s137, 8
      %s139 = scalar_lea.vmem %s1, %s138
      %s140 = smul.u32 4, %s13
      %s141 = smul.u32 4, %s13
      %p142 = scmp.lt.s32.totalorder %s141, 7
      %s143 = scalar_select %p142, %s141, 7
      %s144 = smul.addr %s143, 8
      %s145 = scalar_lea.vmem %s2, %s144
      %s146 = smul.u32 4, %s13
      %v147 = vld [vmem:[%s0] sm:$0xff]
      %v148 = vld [vmem:[%s0 + $0x8] sm:$0xff]
      %v149 = vld [vmem:[%s139] sm:$0xff]
      %v150 = vld [vmem:[%s139 + $0x8] sm:$0xff]
      %v151 = vld [vmem:[%s139 + $0x10] sm:$0xff]
      %v152 = vld [vmem:[%s139 + $0x18] sm:$0xff]
      %vm153 = vcmask 130048
      %v155 = vsel %vm153, %v149, 0
      %v158 = vsel %vm153, %v150, 0
      %v161 = vsel %vm153, %v151, 0
      %v164 = vsel %vm153, %v152, 0
      %166 = vmatprep.subr.mxu0 0.0
      %167 = vmatpush1.msra.mxu0 %v147
      %168 = vmatprep.subr.mxu0 0.0
      %169 = vmatpush1.msra.mxu0 %v148
      %170 = vmatprep.subr.mxu0 0.0
      %171 = vmatpush1.msra.mxu0 0.0
      %172 = vmatprep.subr.mxu0 0.0
      %173 = vmatpush1.msra.mxu0 0.0
      %174 = vmatprep.subr.mxu0 0.0
      %175 = vmatpush1.msra.mxu0 0.0
      %176 = vmatprep.subr.mxu0 0.0
      %177 = vmatpush1.msra.mxu0 0.0
      %178 = vmatprep.subr.mxu0 0.0
      %179 = vmatpush1.msra.mxu0 0.0
      %180 = vmatprep.subr.mxu0 0.0
      %181 = vmatpush1.msra.mxu0 0.0
      %182 = vmatprep.subr.mxu0 0.0
      %183 = vmatpush1.msra.mxu0 0.0
      %184 = vmatprep.subr.mxu0 0.0
      %185 = vmatpush1.msra.mxu0 0.0
      %186 = vmatprep.subr.mxu0 0.0
      %187 = vmatpush1.msra.mxu0 0.0
      %188 = vmatprep.subr.mxu0 0.0
      %189 = vmatpush1.msra.mxu0 0.0
      %190 = vmatprep.subr.mxu0 0.0
      %191 = vmatpush1.msra.mxu0 0.0
      %192 = vmatprep.subr.mxu0 0.0
      %193 = vmatpush1.msra.mxu0 0.0
      %194 = vmatprep.subr.mxu0 0.0
      %195 = vmatpush1.msra.mxu0 0.0
      %196 = vmatprep.subr.mxu0 0.0
      %197 = vmatpush1.msra.mxu0 0.0
      %198 = vmatprep.subr.mxu0 0.0
      %199 = vmatpush1.msra.mxu0 0.0
      %200 = vmatprep.subr.mxu0 0.0
      %201 = vmatpush1.msra.mxu0 0.0
      %202 = vmatprep.subr.mxu0 0.0
      %203 = vmatpush1.msra.mxu0 0.0
      %204 = vmatprep.subr.mxu0 0.0
      %205 = vmatpush1.msra.mxu0 0.0
      %206 = vmatprep.subr.mxu0 0.0
      %207 = vmatpush1.msra.mxu0 0.0
      %208 = vmatprep.subr.mxu0 0.0
      %209 = vmatpush1.msra.mxu0 0.0
      %210 = vmatprep.subr.mxu0 0.0
      %211 = vmatpush1.msra.mxu0 0.0
      %212 = vmatprep.subr.mxu0 0.0
      %213 = vmatpush1.msra.mxu0 0.0
      %214 = vmatprep.subr.mxu0 0.0
      %215 = vmatpush1.msra.mxu0 0.0
      %216 = vmatprep.subr.mxu0 0.0
      %217 = vmatpush1.msra.mxu0 0.0
      %218 = vmatprep.subr.mxu0 0.0
      %219 = vmatpush1.msra.mxu0 0.0
      %220 = vmatprep.subr.mxu0 0.0
      %221 = vmatpush1.msra.mxu0 0.0
      %222 = vmatprep.subr.mxu0 0.0
      %223 = vmatpush1.msra.mxu0 0.0
      %224 = vmatprep.subr.mxu0 0.0
      %225 = vmatpush1.msra.mxu0 0.0
      %226 = vmatprep.subr.mxu0 0.0
      %227 = vmatpush1.msra.mxu0 0.0
      %228 = vmatprep.subr.mxu0 0.0
      %229 = vmatpush1.msra.mxu0 0.0
      %230 = vmatprep.mubr.f32.mxu0 0.0
      %231 = vmatmul.mubr.f32.gmra.mrb[0].mxu0 %v155
      %v232 = vpop.f32.mrb[0].mxu0
      %v233 = vadd.f32 0.0, %v232
      %v234 = vpop.f32.mrb[0].mxu0
      %235 = vmatprep.mubr.f32.mxu0 0.0
      %236 = vmatmul.mubr.f32.gmra.mrb[0].mxu0 %v158
      %v237 = vpop.f32.mrb[0].mxu0
      %v238 = vadd.f32 0.0, %v237
      %v239 = vpop.f32.mrb[0].mxu0
      %240 = vmatprep.mubr.f32.mxu0 0.0
      %241 = vmatmul.mubr.f32.gmra.mrb[0].mxu0 %v161
      %v242 = vpop.f32.mrb[0].mxu0
      %v243 = vadd.f32 0.0, %v242
      %v244 = vpop.f32.mrb[0].mxu0
      %245 = vmatprep.mubr.f32.mxu0 0.0
      %246 = vmatmul.mubr.f32.gmra.mrb[0].mxu0 %v164
      %v247 = vpop.f32.mrb[0].mxu0
      %v248 = vadd.f32 0.0, %v247
      %v249 = vpop.f32.mrb[0].mxu0
      %250 = vdwg.mxu0
      %251 = vst.msk [vmem:[%s145] sm:$0xff] %vm153, %v233
      %252 = vst.msk [vmem:[%s145 + $0x8] sm:$0xff] %vm153, %v238
      %253 = vst.msk [vmem:[%s145 + $0x10] sm:$0xff] %vm153, %v243
      %254 = vst.msk [vmem:[%s145 + $0x18] sm:$0xff] %vm153, %v248
      %s255 = smul.u32 4, %s13
      %p256 = scmp.lt.s32.totalorder %s255, 7
      %s257 = scalar_select %p256, %s255, 7
      %s258 = smul.addr %s257, 8
      %s259 = scalar_lea.vmem %s2, %s258
      // Predicated region
      $region29: #{branch_1_fun.2} parent=27 // pred_check
        %p260 = pneg %p78
      $region30: #{branch_1_fun.2} parent=27 // pred_check_branch
        %262 = sbr.rel (%p260) target = $region32
      $region31: #{branch_1_fun.2} parent=27 // pred_region
        %s263 = smul.u32 4, %s13
      $region32: #{branch_1_fun.2} parent=27 // pred_fallthru
        _
    $region28: #{branch_1_fun.2} parent=5 // pred_fallthru
      _
    %p264 = scmp.le.s32.totalorder 2, %s8
    // Predicated region
    $region33: #{branch_1_fun.2} parent=5 // pred_check
      %p265 = pneg %p264
    $region34: #{branch_1_fun.2} parent=5 // pred_check_branch
      %267 = sbr.rel (%p265) target = $region36
    $region35: #{branch_1_fun.2} parent=5 // pred_region
      %s268 = ssub.s32 %s8, 2
      // Predicated region
      $region37: #{branch_1_fun.2} parent=35 // pred_check
        %p269 = pneg %p84
      $region38: #{branch_1_fun.2} parent=35 // pred_check_branch
        %271 = sbr.rel (%p269) target = $region40
      $region39: #{branch_1_fun.2} parent=35 // pred_region
        %s272 = smul.u32 4, %s14
        %p273 = scmp.lt.s32.totalorder %s272, 7
        %s274 = scalar_select %p273, %s272, 7
        %s275 = smul.addr %s274, 8
        %s276 = scalar_lea.vmem %s2, %s275
      $region40: #{branch_1_fun.2} parent=35 // pred_fallthru
        _
    $region36: #{branch_1_fun.2} parent=5 // pred_fallthru
      _
  $region6: #{branch_1_fun.2} parent=0 // loop_footer
    %s12 = sadd.s32 1, %s8
  $region7: #{branch_1_fun.2} parent=0 // loop_footer_branch
    %7 = sbr.rel target = $region3
  $region8: #{branch_1_fun.2} parent=0 // loop_exit
    _

</llo_original>
